<compile_context>
chip_gen: v7x
topology: tpu7x:2x2x1
jax: 0.10.0
libtpu: 0.0.40
codegen_flags: <defaults>
</compile_context>

<pallas_src>
import math

import jax
import jax.numpy as jnp
from jax.experimental import pallas as pl
from jax.experimental.pallas import tpu as pltpu


_LANE = 128
_HARD_SUBLANE = 8                       # the (8, 128) block-shape rule
_TARGET_BLOCK_BYTES = 4 * 1024 * 1024   # regular seq-tiled path (~4 MiB blocks)
_FOLD_BLOCK_BYTES = 2 * 1024 * 1024     # batch-folded path (PE pre-tiled to one block)
# 3 arrays x 2 buffers x 4 MiB = 24 MiB.  Set the scoped-VMEM limit explicitly:
# > v5e's 16 MiB default, <= v6e/v7x 32 MiB default, and well under every
# generation's physical VMEM (v7x has only 64 MiB).
_VMEM_LIMIT_BYTES = 32 * 1024 * 1024
# Below this the fused XLA add is already at roofline; pallas_call launch +
# pipeline warmup would only add overhead.
_XLA_FALLBACK_BYTES = 4 * 1024 * 1024


def _pe_add_kernel(x_ref, pe_ref, o_ref):
    # Elementwise add of the (batch-broadcast) positional-encoding tile.
    o_ref[...] = x_ref[...] + pe_ref[...]


def make_pe_table(d_model: int, seq_len: int, dtype=jnp.float32) -> jnp.ndarray:
    """Deterministic sinusoidal PE table, identical to the PyTorch __init__.

    Build it ONCE in the activation dtype (e.g. dtype=jnp.bfloat16) so the
    forward pass never has to convert the full (1, seq_len, d_model) buffer.
    Note: like the canonical PyTorch snippet, this assumes even d_model.
    """
    position = jnp.arange(0, seq_len, dtype=jnp.float32)[:, None]             # (S, 1)
    div_term = jnp.exp(
        jnp.arange(0, d_model, 2, dtype=jnp.float32) * (-math.log(10000.0) / d_model)
    )                                                                          # (D/2,)
    pe = jnp.zeros((seq_len, d_model), dtype=jnp.float32)
    pe = pe.at[:, 0::2].set(jnp.sin(position * div_term))
    pe = pe.at[:, 1::2].set(jnp.cos(position * div_term))
    return pe[None, :, :].astype(dtype)                                        # (1, S, D)


def _sublane(dtype) -> int:
    """Dtype-aware sublane alignment (sub-32-bit dtypes pack along sublanes)."""
    return {4: 8, 2: 16, 1: 32}.get(jnp.dtype(dtype).itemsize, _HARD_SUBLANE)


def _compiler_params(ndims: int) -> pltpu.CompilerParams:
    return pltpu.CompilerParams(
        # "parallel" also lets the grid shard across v7x's two TensorCores.
        dimension_semantics=("parallel",) * ndims,
        vmem_limit_bytes=_VMEM_LIMIT_BYTES,
    )


def _cost(B: int, R: int, L: int, pe_rows: int, itemsize: int) -> pl.CostEstimate:
    # x read + out write + one PE stream (PE DMA is skipped across batch steps).
    return pl.CostEstimate(
        flops=B * R * L,
        transcendentals=0,
        bytes_accessed=(2 * B * R * L + pe_rows * L) * itemsize,
    )


def _pick_rows(total_rows: int, row_bytes: int, sublane: int) -> int:
    """Rows per block: ~_TARGET_BLOCK_BYTES, sublane-aligned, prefer an even divisor."""
    t = max(1, _TARGET_BLOCK_BYTES // max(row_bytes, 1))
    if t >= total_rows:
        return total_rows            # block == full dim always satisfies the (8,128) rule
    t = max(sublane, (t // sublane) * sublane)
    # Prefer the largest aligned divisor of total_rows within 2x of the target,
    # so the last grid step is not a masked partial block.
    d = t
    while d >= sublane and d * 2 >= t:
        if total_rows % d == 0:
            return d
        d -= sublane
    return t


def _pallas_add_folded(x3: jnp.ndarray, pe3: jnp.ndarray, k: int) -> jnp.ndarray:
    """Small per-batch extents: fold k batch elements into one block.

    x3: (B, R, L); pe3: (1, R_full >= R, L); k divides B.
    The PE window is pre-tiled (wrapper-side, ~1 block of bytes) so the kernel
    stays a plain add and its PE block index is constant -> DMA'd once.
    """
    B, R, L = x3.shape
    rows_fold = k * R
    pe_win = pe3 if pe3.shape[1] == R else pe3[:, :R, :]
    pe_fold = jnp.tile(pe_win, (1, k, 1))                 # (1, rows_fold, L) == one block
    x2 = x3.reshape(1, B * R, L)                          # row-major view, no copy
    out = pl.pallas_call(
        _pe_add_kernel,
        out_shape=jax.ShapeDtypeStruct((1, B * R, L), x3.dtype),
        grid_spec=pltpu.PrefetchScalarGridSpec(
            num_scalar_prefetch=0,
            grid=(B // k,),
            in_specs=[
                pl.BlockSpec((1, rows_fold, L), lambda i: (0, i, 0)),   # x slab
                pl.BlockSpec((1, rows_fold, L), lambda i: (0, 0, 0)),   # PE (constant index)
            ],
            out_specs=pl.BlockSpec((1, rows_fold, L), lambda i: (0, i, 0)),
        ),
        compiler_params=_compiler_params(1),
        cost_estimate=_cost(B, R, L, rows_fold, x3.dtype.itemsize),
    )(x2, pe_fold)
    return out.reshape(B, R, L)


def _pallas_add_tiled(x3: jnp.ndarray, pe3: jnp.ndarray) -> jnp.ndarray:
    """x3: (B, R, L); pe3: (1, R_full >= R, L).  Returns x3 + pe3[:, :R, :]."""
    B, R, L = x3.shape
    itemsize = x3.dtype.itemsize

    # Batch folding: when a per-batch (R, L) slab is much smaller than a block,
    # per-step pipeline overhead would dominate; pack k batch elements/block.
    if B > 1 and 2 * R * L * itemsize <= _FOLD_BLOCK_BYTES:
        k = min(_FOLD_BLOCK_BYTES // (R * L * itemsize), B)
        while k > 1 and B % k != 0:      # avoid a ragged tail block over batches
            k -= 1
        if k > 1 and ((k * R) % _HARD_SUBLANE == 0 or k == B):
            return _pallas_add_folded(x3, pe3, k)

    rows = _pick_rows(R, L * itemsize, _sublane(x3.dtype))
    if rows % _HARD_SUBLANE != 0 and pe3.shape[1] != R:
        # Only possible when rows == R < 8: make the PE block equal its full dim.
        pe3 = pe3[:, :R, :]
    n_r = pl.cdiv(R, rows)
    return pl.pallas_call(
        _pe_add_kernel,
        out_shape=jax.ShapeDtypeStruct((B, R, L), x3.dtype),
        grid_spec=pltpu.PrefetchScalarGridSpec(
            num_scalar_prefetch=0,
            # Batch innermost: the PE block index (0, r, 0) is constant across
            # consecutive b steps, so Pallas skips the redundant PE DMA and PE
            # HBM traffic is ~S*D instead of B*S*D.
            grid=(n_r, B),
            in_specs=[
                pl.BlockSpec((1, rows, L), lambda r, b: (b, r, 0)),   # x tile
                pl.BlockSpec((1, rows, L), lambda r, b: (0, r, 0)),   # PE tile (window via index)
            ],
            out_specs=pl.BlockSpec((1, rows, L), lambda r, b: (b, r, 0)),
        ),
        compiler_params=_compiler_params(2),
        cost_estimate=_cost(B, R, L, R, itemsize),
    )(x3, pe3)


def positional_encoding_forward(
    x: jnp.ndarray, pe: jnp.ndarray, *, force_pallas: bool = False
) -> jnp.ndarray:
    """out = dropout(x + pe[:, :S, :]) with dropout as identity (eval mode).

    x: (B, S, D); pe: (1, seq_len_max, D) with seq_len_max >= S, ideally already
    in x.dtype (make_pe_table(..., dtype=x.dtype)).
    """
    B, S, D = x.shape
    assert pe.shape[0] == 1 and pe.shape[2] == D and pe.shape[1] >= S

    if pe.dtype != x.dtype:
        # Safety net only: precompute the table in the activation dtype so this
        # full-buffer convert pass never runs per call.
        pe = pe.astype(x.dtype)

    # Tiny inputs: the fused XLA add is already at roofline; Pallas launch +
    # pipeline warmup would only add overhead.
    if not force_pallas and x.size * x.dtype.itemsize < _XLA_FALLBACK_BYTES:
        return x + pe[:, :S, :]

    if D % _LANE == 0:
        # Already lane-dense: tile (and/or batch-fold) the sequence dimension
        # directly; the pe[:, :S, :] window is selected via the BlockSpec.
        return _pallas_add_tiled(x, pe)

    if (S * D) % _LANE == 0:
        # Lane-densify: row-major flatten (S, D) -> (S*D//128, 128) so stores
        # are unmasked full-lane vst.
        R = (S * D) // _LANE
        x3 = x.reshape(B, R, _LANE)
        if (pe.shape[1] * D) % _LANE == 0:
            pe3 = pe.reshape(1, (pe.shape[1] * D) // _LANE, _LANE)
        else:
            pe3 = pe[:, :S, :].reshape(1, R, _LANE)
        return _pallas_add_tiled(x3, pe3).reshape(B, S, D)

    # Awkward shapes (S*D not a multiple of 128): lane-pad D up to the next
    # multiple of 128, run the lane-dense path, slice the padding back off.
    d_pad = ((D + _LANE - 1) // _LANE) * _LANE
    x_p = jnp.pad(x, ((0, 0), (0, 0), (0, d_pad - D)))
    pe_p = jnp.pad(pe, ((0, 0), (0, 0), (0, d_pad - D)))
    out = _pallas_add_tiled(x_p, pe_p)
    return out[:, :, :D]
    # TODO(synk): training-mode dropout is not implemented (identity here); it
    # would need in-kernel pltpu.prng_seed / prng_random_bits masking with
    # 1/(1-p) rescale for parity with a training-mode PyTorch module.


if __name__ == "__main__":
    key = jax.random.PRNGKey(0)
    k1, k2, k3, k4 = jax.random.split(key, 4)

    # Case 1: module-like shapes (batch=2, seq=8, d_model=32, buffer seq_len=16)
    # -> lane-densifying flatten + batch-folded path.
    B, S, D = 2, 8, 32
    seq_len_max = 16
    x = jax.random.normal(k1, (B, S, D), dtype=jnp.float32)
    pe = make_pe_table(d_model=D, seq_len=seq_len_max, dtype=x.dtype)
    out = jax.block_until_ready(positional_encoding_forward(x, pe, force_pallas=True))
    ref = x + pe[:, :S, :]
    assert out.shape == (B, S, D)
    assert jnp.allclose(out, ref, atol=1e-6), "mismatch (flatten + fold path)"

    # Case 2: d_model multiple of 128 -> direct lane-dense path (batch-folded).
    x2 = jax.random.normal(k2, (2, 8, 128), dtype=jnp.float32)
    pe2 = make_pe_table(d_model=128, seq_len=seq_len_max, dtype=x2.dtype)
    out2 = jax.block_until_ready(positional_encoding_forward(x2, pe2, force_pallas=True))
    assert jnp.allclose(out2, x2 + pe2[:, :8, :], atol=1e-6), "mismatch (lane-dense path)"

    # Case 3: batch=1 -> regular seq-tiled grid path (no batch folding).
    x3 = jax.random.normal(k3, (1, 64, 128), dtype=jnp.float32)
    pe3 = make_pe_table(d_model=128, seq_len=64, dtype=x3.dtype)
    out3 = jax.block_until_ready(positional_encoding_forward(x3, pe3, force_pallas=True))
    assert jnp.allclose(out3, x3 + pe3[:, :64, :], atol=1e-6), "mismatch (seq-tiled path)"

    # Case 4: awkward d_model (S*D not a multiple of 128) -> lane-padding path.
    x4 = jax.random.normal(k4, (2, 7, 40), dtype=jnp.float32)
    pe4 = make_pe_table(d_model=40, seq_len=seq_len_max, dtype=x4.dtype)
    out4 = jax.block_until_ready(positional_encoding_forward(x4, pe4, force_pallas=True))
    assert jnp.allclose(out4, x4 + pe4[:, :7, :], atol=1e-6), "mismatch (lane-pad path)"

    print("KERNEL_OK")
</pallas_src>

<mosaic_0001>
module attributes {stable_mosaic.version = 11 : i64} {
  func.func @_pe_add_kernel(%arg0: i32, %arg1: memref<1x4x128xf32, #tpu.memory_space<vmem>>, %arg2: memref<1x4x128xf32, #tpu.memory_space<vmem>>, %arg3: memref<1x4x128xf32, #tpu.memory_space<vmem>>) attributes {dimension_semantics = [#tpu.dimension_semantics<parallel>], iteration_bounds = array<i64: 1>, scalar_prefetch = 0 : i64, scratch_operands = 0 : i64, tpu.core_type = #tpu.core_type<tc>, window_params = [{transform_indices = @transform_0, window_bounds = array<i64: 1, 4, 128>}, {pipeline_mode = #tpu.pipeline_mode<synchronous>, transform_indices = @transform_1, window_bounds = array<i64: 1, 4, 128>}, {transform_indices = @transform_2, window_bounds = array<i64: 1, 4, 128>}]} {
    %c0 = arith.constant 0 : index
    %c0_0 = arith.constant 0 : index
    %c0_1 = arith.constant 0 : index
    %0 = vector.load %arg1[%c0, %c0_0, %c0_1] : memref<1x4x128xf32, #tpu.memory_space<vmem>>, vector<1x4x128xf32>
    %c0_2 = arith.constant 0 : index
    %c0_3 = arith.constant 0 : index
    %c0_4 = arith.constant 0 : index
    %1 = vector.load %arg2[%c0_2, %c0_3, %c0_4] : memref<1x4x128xf32, #tpu.memory_space<vmem>>, vector<1x4x128xf32>
    %2 = arith.addf %0, %1 : vector<1x4x128xf32>
    %c0_5 = arith.constant 0 : index
    %c0_6 = arith.constant 0 : index
    %c0_7 = arith.constant 0 : index
    %3 = vector.load %arg3[%c0_5, %c0_6, %c0_7] : memref<1x4x128xf32, #tpu.memory_space<vmem>>, vector<1x4x128xf32>
    tpu.vector_store %arg3[%c0_5, %c0_6, %c0_7], %2 {strides = array<i32>} : memref<1x4x128xf32, #tpu.memory_space<vmem>>, vector<1x4x128xf32>,
    return
  }
  func.func @transform_0(%arg0: i32) -> (i32, i32, i32) {
    %c0_i32 = arith.constant 0 : i32
    %c0_i32_0 = arith.constant 0 : i32
    %c0_i32_1 = arith.constant 0 : i32
    return %c0_i32, %arg0, %c0_i32_0 : i32, i32, i32
  }
  func.func @transform_1(%arg0: i32) -> (i32, i32, i32) {
    %c0_i32 = arith.constant 0 : i32
    %c0_i32_0 = arith.constant 0 : i32
    %c0_i32_1 = arith.constant 0 : i32
    %c0_i32_2 = arith.constant 0 : i32
    return %c0_i32, %c0_i32_0, %c0_i32_1 : i32, i32, i32
  }
  func.func @transform_2(%arg0: i32) -> (i32, i32, i32) {
    %c0_i32 = arith.constant 0 : i32
    %c0_i32_0 = arith.constant 0 : i32
    %c0_i32_1 = arith.constant 0 : i32
    return %c0_i32, %arg0, %c0_i32_0 : i32, i32, i32
  }
}

</mosaic_0001>

<llo_original>
// kernel: tpu_custom_call.1
$region0: #{tpu_custom_call.1}
  #allocation0 [shape = 'u32[]', space=smem, size = 0x4, offset = 0x4, fixed_abs, tag = 'smem constant byte address 0x4 - core index']
  #allocation1 [shape = 'u32[144,128]{1,0:T(1,128)}', space=vmem, size = 0x12000, scoped, tag = 'internal scratch']
  %s0 = inlined_call_operand.hbm [shape: f32[1,4,128], index: 0, kind: input, shape index: {}]
  %s1 = inlined_call_operand.hbm [shape: f32[1,4,128], index: 1, kind: input, shape index: {}]
  %s2 = inlined_call_operand.hbm [shape: f32[1,4,128], index: 2, kind: output, shape index: {}]
  %s3 = sld [smem:[#allocation0]]
  $region26: #{tpu_custom_call.1} parent=0
    _
  %s5 = ssub.s32 1, %s3
  %s6 = scalar_select 0, %s5, %s3
  $region1: #{tpu_custom_call.1} parent=0
    #allocation2 [shape = 'u8[2048]{0}', space=vmem, size = 0x800, scoped, tag = 'input window, operand 0, single buffered']
    #allocation3 [shape = 's32[1]{0}', space=sflag, size = 0x4, scoped, tag = 'scoped memory for tpu_custom_call.1']
    #allocation4 [shape = 's32[1]{0}', space=sflag, size = 0x4, scoped, tag = 'scoped memory for tpu_custom_call.1']
    #allocation5 [shape = 'u8[2048]{0}', space=vmem, size = 0x800, scoped, tag = 'input window, operand 1, single buffered']
    #allocation6 [shape = 's32[1]{0}', space=sflag, size = 0x4, scoped, tag = 'scoped memory for tpu_custom_call.1']
    #allocation7 [shape = 'u8[2048]{0}', space=vmem, size = 0x800, scoped, tag = 'output window, operand 0, single buffered']
    %7 = vsyncpa [#allocation3], 0
    %8 = vsyncpa [#allocation6], 0
    %9 = vsyncpa [#allocation4], 0
    // Predicated region
    $region2: #{tpu_custom_call.1} parent=1 // pred_check
      _
    $region3: #{tpu_custom_call.1} parent=1 // pred_check_branch
      %11 = sbr.rel (0) target = $region5
    $region4: #{tpu_custom_call.1} parent=1 // pred_region
      %s13 = ssub.s32 64, 64
      %14 = vsyncadd [#allocation3], %s13
      %s16 = sshll.u32 [#allocation2], 4
      %s17 = int_to_ptr.vmem [resolvable:$true] %s16
      %19 = dma.hbm_to_vmem [thread:$0]  %s0, 64, %s17, [#allocation3]
    $region5: #{tpu_custom_call.1} parent=1 // pred_fallthru
      _
    // Predicated region
    $region6: #{tpu_custom_call.1} parent=1 // pred_check
      _
    $region7: #{tpu_custom_call.1} parent=1 // pred_check_branch
      %21 = sbr.rel (0) target = $region9
    $region8: #{tpu_custom_call.1} parent=1 // pred_region
      %s23 = ssub.s32 64, 64
      %24 = vsyncadd [#allocation6], %s23
      %s26 = sshll.u32 [#allocation5], 4
      %s27 = int_to_ptr.vmem [resolvable:$true] %s26
      %29 = dma.hbm_to_vmem [thread:$0]  %s1, 64, %s27, [#allocation6]
    $region9: #{tpu_custom_call.1} parent=1 // pred_fallthru
      _
    // Predicated region
    $region10: #{tpu_custom_call.1} parent=1 // pred_check
      _
    $region11: #{tpu_custom_call.1} parent=1 // pred_check_branch
      %31 = sbr.rel (0) target = $region13
    $region12: #{tpu_custom_call.1} parent=1 // pred_region
      %32 = dma.done [#allocation3], 64
    $region13: #{tpu_custom_call.1} parent=1 // pred_fallthru
      _
    // Predicated region
    $region14: #{tpu_custom_call.1} parent=1 // pred_check
      _
    $region15: #{tpu_custom_call.1} parent=1 // pred_check_branch
      %34 = sbr.rel (0) target = $region17
    $region16: #{tpu_custom_call.1} parent=1 // pred_region
      %35 = dma.done [#allocation6], 64
    $region17: #{tpu_custom_call.1} parent=1 // pred_fallthru
      _
    %v36 = vld [vmem:[#allocation2] sm:$0xf]
    %v37 = vld [vmem:[#allocation5] sm:$0xf]
    %v38 = vadd.f32 %v36, %v37
    %39 = vst [vmem:[#allocation7] sm:$0xf] %v38
    // Predicated region
    $region18: #{tpu_custom_call.1} parent=1 // pred_check
      _
    $region19: #{tpu_custom_call.1} parent=1 // pred_check_branch
      %41 = sbr.rel (0) target = $region21
    $region20: #{tpu_custom_call.1} parent=1 // pred_region
      %s43 = ssub.s32 64, 64
      %44 = vsyncadd [#allocation4], %s43
      %s46 = sshll.u32 [#allocation7], 4
      %s47 = int_to_ptr.vmem [resolvable:$true] %s46
      %49 = dma.vmem_to_hbm [thread:$0]  %s47, 64, %s2, [#allocation4]
    $region21: #{tpu_custom_call.1} parent=1 // pred_fallthru
      _
    // Predicated region
    $region22: #{tpu_custom_call.1} parent=1 // pred_check
      _
    $region23: #{tpu_custom_call.1} parent=1 // pred_check_branch
      %51 = sbr.rel (0) target = $region25
    $region24: #{tpu_custom_call.1} parent=1 // pred_region
      %52 = dma.done [#allocation4], 64
    $region25: #{tpu_custom_call.1} parent=1 // pred_fallthru
      _
    %53 = vsyncpa [#allocation3], 1
    %54 = vsyncpa [#allocation6], 1
    %55 = vsyncpa [#allocation4], 1

</llo_original>
